<compile_context>
chip_gen: v5e
topology: v5e:2x2
jax: 0.10.0
libtpu: 0.0.40
codegen_flags: <defaults>
</compile_context>

<pallas_src>
import jax
import jax.numpy as jnp
from jax import lax
from jax.experimental import pallas as pl
from jax.experimental.pallas import tpu as pltpu

KH = KW = 3          # kernel size
C_OUT = 32           # output channels
C_IN = 1             # input channels
N_TAPS = KH * KW     # 9


def _conv_kernel(p_ref, w_ref, b_ref, o_ref):
    # p_ref: (NB, 9, P)     flattened shifted windows, P = Ho*Wo on the lane axis
    # w_ref: (C_OUT, 9)     per-output-channel taps
    # b_ref: (C_OUT, 1)
    # o_ref: (NB, C_OUT, P) NCHW-compatible output block
    nb, _, p = p_ref.shape
    w = w_ref[...]                                   # (32, 9): load once, vreg-resident
    b = b_ref[...]                                   # (32, 1)
    for img in range(nb):                            # small static unroll over images
        pats = p_ref[img]                            # (9, P)
        acc = jnp.broadcast_to(b, (C_OUT, p))        # bias-initialized accumulator
        for k in range(N_TAPS):
            # (32,1) tap column * (1,P) patch row -> (32,P) VPU FMA, lane-dense
            acc = acc + w[:, k:k + 1] * pats[k:k + 1, :]
        o_ref[img] = acc.astype(o_ref.dtype)


@jax.jit
def conv_forward(x_nchw, weight, bias):
    """x_nchw: (N, 1, H, W) f32; weight: (32, 1, 3, 3); bias: (32,) -> (N, 32, Ho, Wo)."""
    n, c, h, w = x_nchw.shape
    assert c == C_IN
    assert h >= KH and w >= KW, "valid conv needs H, W >= 3"
    ho, wo = h - KH + 1, w - KW + 1
    p = ho * wo

    x = x_nchw[:, 0]                                        # (N, H, W)
    # Layout plumbing: 9 shifted windows, each flattened onto the lane axis.
    patches = jnp.stack(
        [x[:, kh:kh + ho, kw:kw + wo].reshape(n, p)
         for kh in range(KH) for kw in range(KW)],
        axis=1)                                             # (N, 9, Ho*Wo)

    w_taps = weight[:, 0].reshape(C_OUT, N_TAPS).astype(jnp.float32)  # (32, 9)
    b_col = bias.reshape(C_OUT, 1).astype(jnp.float32)                # (32, 1)

    # Batch images per grid step (amortize per-step overhead) but keep >= 2
    # steps so the "parallel" grid axis can span both TensorCores on v7x.
    nb = n // 2 if (n % 2 == 0 and n >= 2) else 1
    grid = (n // nb,)

    out_flat = pl.pallas_call(
        _conv_kernel,
        out_shape=jax.ShapeDtypeStruct((n, C_OUT, p), jnp.float32),
        grid_spec=pltpu.PrefetchScalarGridSpec(
            num_scalar_prefetch=0,
            grid=grid,
            in_specs=[
                pl.BlockSpec((nb, N_TAPS, p), lambda i: (i, 0, 0)),
                pl.BlockSpec((C_OUT, N_TAPS), lambda i: (0, 0)),
                pl.BlockSpec((C_OUT, 1), lambda i: (0, 0)),
            ],
            out_specs=pl.BlockSpec((nb, C_OUT, p), lambda i: (i, 0, 0)),
        ),
        compiler_params=pltpu.CompilerParams(
            dimension_semantics=("parallel",),
            vmem_limit_bytes=32 * 1024 * 1024,
        ),
    )(patches, w_taps, b_col)

    # (N, 32, Ho*Wo) is already NCHW-contiguous -> free reshape, no transpose.
    return out_flat.reshape(n, C_OUT, ho, wo)


def _reference(x_nchw, weight, bias):
    out = lax.conv_general_dilated(
        x_nchw, weight, window_strides=(1, 1), padding="VALID",
        dimension_numbers=("NCHW", "OIHW", "NCHW"))
    return out + bias[None, :, None, None]


if __name__ == "__main__":
    key = jax.random.PRNGKey(0)
    kx, kw_, kb = jax.random.split(key, 3)

    # Small shapes consistent with the module: N=2, C_in=1, H=W=16.
    x = jax.random.normal(kx, (2, 1, 16, 16), dtype=jnp.float32)

    # Deterministic PyTorch-style uniform fan-in init.
    fan_in = C_IN * KH * KW
    bound = 1.0 / (fan_in ** 0.5)
    weight = jax.random.uniform(kw_, (C_OUT, C_IN, KH, KW),
                                minval=-bound, maxval=bound, dtype=jnp.float32)
    bias = jax.random.uniform(kb, (C_OUT,),
                              minval=-bound, maxval=bound, dtype=jnp.float32)

    out = conv_forward(x, weight, bias)
    jax.block_until_ready(out)

    ref = _reference(x, weight, bias)
    assert out.shape == (2, C_OUT, 14, 14), out.shape
    assert jnp.allclose(out, ref, atol=1e-5, rtol=1e-5), "mismatch vs reference"

    print("KERNEL_OK")
</pallas_src>

<mosaic_0001>
module attributes {stable_mosaic.version = 11 : i64} {
  func.func @_conv_kernel(%arg0: i32, %arg1: memref<1x9x196xf32, #tpu.memory_space<vmem>>, %arg2: memref<32x9xf32, #tpu.memory_space<vmem>>, %arg3: memref<32x1xf32, #tpu.memory_space<vmem>>, %arg4: memref<1x32x196xf32, #tpu.memory_space<vmem>>) attributes {dimension_semantics = [#tpu.dimension_semantics<parallel>], iteration_bounds = array<i64: 2>, scalar_prefetch = 0 : i64, scratch_operands = 0 : i64, tpu.core_type = #tpu.core_type<tc>, window_params = [{transform_indices = @transform_0, window_bounds = array<i64: 1, 9, 196>}, {pipeline_mode = #tpu.pipeline_mode<synchronous>, transform_indices = @transform_1, window_bounds = array<i64: 32, 9>}, {pipeline_mode = #tpu.pipeline_mode<synchronous>, transform_indices = @transform_2, window_bounds = array<i64: 32, 1>}, {transform_indices = @transform_3, window_bounds = array<i64: 1, 32, 196>}]} {
    %c0 = arith.constant 0 : index
    %c0_0 = arith.constant 0 : index
    %0 = vector.load %arg2[%c0, %c0_0] : memref<32x9xf32, #tpu.memory_space<vmem>>, vector<32x9xf32>
    %c0_1 = arith.constant 0 : index
    %c0_2 = arith.constant 0 : index
    %1 = vector.load %arg3[%c0_1, %c0_2] : memref<32x1xf32, #tpu.memory_space<vmem>>, vector<32x1xf32>
    %c0_3 = arith.constant 0 : index
    %c0_4 = arith.constant 0 : index
    %c0_5 = arith.constant 0 : index
    %2 = vector.load %arg1[%c0_3, %c0_4, %c0_5] : memref<1x9x196xf32, #tpu.memory_space<vmem>>, vector<1x9x196xf32>
    %3 = vector.shape_cast %2 : vector<1x9x196xf32> to vector<9x196xf32>
    %4 = vector.shape_cast %1 : vector<32x1xf32> to vector<32x1xf32>
    %5 = vector.broadcast %4 : vector<32x1xf32> to vector<32x196xf32>
    %6 = vector.extract_strided_slice %0 {offsets = [0, 0], sizes = [32, 1], strides = [1, 1]} : vector<32x9xf32> to vector<32x1xf32>
    %7 = vector.extract_strided_slice %3 {offsets = [0, 0], sizes = [1, 196], strides = [1, 1]} : vector<9x196xf32> to vector<1x196xf32>
    %8 = vector.broadcast %6 : vector<32x1xf32> to vector<32x196xf32>
    %9 = vector.broadcast %7 : vector<1x196xf32> to vector<32x196xf32>
    %10 = arith.mulf %8, %9 : vector<32x196xf32>
    %11 = arith.addf %5, %10 : vector<32x196xf32>
    %12 = vector.extract_strided_slice %0 {offsets = [0, 1], sizes = [32, 1], strides = [1, 1]} : vector<32x9xf32> to vector<32x1xf32>
    %13 = vector.extract_strided_slice %3 {offsets = [1, 0], sizes = [1, 196], strides = [1, 1]} : vector<9x196xf32> to vector<1x196xf32>
    %14 = vector.broadcast %12 : vector<32x1xf32> to vector<32x196xf32>
    %15 = vector.broadcast %13 : vector<1x196xf32> to vector<32x196xf32>
    %16 = arith.mulf %14, %15 : vector<32x196xf32>
    %17 = arith.addf %11, %16 : vector<32x196xf32>
    %18 = vector.extract_strided_slice %0 {offsets = [0, 2], sizes = [32, 1], strides = [1, 1]} : vector<32x9xf32> to vector<32x1xf32>
    %19 = vector.extract_strided_slice %3 {offsets = [2, 0], sizes = [1, 196], strides = [1, 1]} : vector<9x196xf32> to vector<1x196xf32>
    %20 = vector.broadcast %18 : vector<32x1xf32> to vector<32x196xf32>
    %21 = vector.broadcast %19 : vector<1x196xf32> to vector<32x196xf32>
    %22 = arith.mulf %20, %21 : vector<32x196xf32>
    %23 = arith.addf %17, %22 : vector<32x196xf32>
    %24 = vector.extract_strided_slice %0 {offsets = [0, 3], sizes = [32, 1], strides = [1, 1]} : vector<32x9xf32> to vector<32x1xf32>
    %25 = vector.extract_strided_slice %3 {offsets = [3, 0], sizes = [1, 196], strides = [1, 1]} : vector<9x196xf32> to vector<1x196xf32>
    %26 = vector.broadcast %24 : vector<32x1xf32> to vector<32x196xf32>
    %27 = vector.broadcast %25 : vector<1x196xf32> to vector<32x196xf32>
    %28 = arith.mulf %26, %27 : vector<32x196xf32>
    %29 = arith.addf %23, %28 : vector<32x196xf32>
    %30 = vector.extract_strided_slice %0 {offsets = [0, 4], sizes = [32, 1], strides = [1, 1]} : vector<32x9xf32> to vector<32x1xf32>
    %31 = vector.extract_strided_slice %3 {offsets = [4, 0], sizes = [1, 196], strides = [1, 1]} : vector<9x196xf32> to vector<1x196xf32>
    %32 = vector.broadcast %30 : vector<32x1xf32> to vector<32x196xf32>
    %33 = vector.broadcast %31 : vector<1x196xf32> to vector<32x196xf32>
    %34 = arith.mulf %32, %33 : vector<32x196xf32>
    %35 = arith.addf %29, %34 : vector<32x196xf32>
    %36 = vector.extract_strided_slice %0 {offsets = [0, 5], sizes = [32, 1], strides = [1, 1]} : vector<32x9xf32> to vector<32x1xf32>
    %37 = vector.extract_strided_slice %3 {offsets = [5, 0], sizes = [1, 196], strides = [1, 1]} : vector<9x196xf32> to vector<1x196xf32>
    %38 = vector.broadcast %36 : vector<32x1xf32> to vector<32x196xf32>
    %39 = vector.broadcast %37 : vector<1x196xf32> to vector<32x196xf32>
    %40 = arith.mulf %38, %39 : vector<32x196xf32>
    %41 = arith.addf %35, %40 : vector<32x196xf32>
    %42 = vector.extract_strided_slice %0 {offsets = [0, 6], sizes = [32, 1], strides = [1, 1]} : vector<32x9xf32> to vector<32x1xf32>
    %43 = vector.extract_strided_slice %3 {offsets = [6, 0], sizes = [1, 196], strides = [1, 1]} : vector<9x196xf32> to vector<1x196xf32>
    %44 = vector.broadcast %42 : vector<32x1xf32> to vector<32x196xf32>
    %45 = vector.broadcast %43 : vector<1x196xf32> to vector<32x196xf32>
    %46 = arith.mulf %44, %45 : vector<32x196xf32>
    %47 = arith.addf %41, %46 : vector<32x196xf32>
    %48 = vector.extract_strided_slice %0 {offsets = [0, 7], sizes = [32, 1], strides = [1, 1]} : vector<32x9xf32> to vector<32x1xf32>
    %49 = vector.extract_strided_slice %3 {offsets = [7, 0], sizes = [1, 196], strides = [1, 1]} : vector<9x196xf32> to vector<1x196xf32>
    %50 = vector.broadcast %48 : vector<32x1xf32> to vector<32x196xf32>
    %51 = vector.broadcast %49 : vector<1x196xf32> to vector<32x196xf32>
    %52 = arith.mulf %50, %51 : vector<32x196xf32>
    %53 = arith.addf %47, %52 : vector<32x196xf32>
    %54 = vector.extract_strided_slice %0 {offsets = [0, 8], sizes = [32, 1], strides = [1, 1]} : vector<32x9xf32> to vector<32x1xf32>
    %55 = vector.extract_strided_slice %3 {offsets = [8, 0], sizes = [1, 196], strides = [1, 1]} : vector<9x196xf32> to vector<1x196xf32>
    %56 = vector.broadcast %54 : vector<32x1xf32> to vector<32x196xf32>
    %57 = vector.broadcast %55 : vector<1x196xf32> to vector<32x196xf32>
    %58 = arith.mulf %56, %57 : vector<32x196xf32>
    %59 = arith.addf %53, %58 : vector<32x196xf32>
    %c0_6 = arith.constant 0 : index
    %c0_7 = arith.constant 0 : index
    %c0_8 = arith.constant 0 : index
    %60 = vector.load %arg4[%c0_6, %c0_7, %c0_8] : memref<1x32x196xf32, #tpu.memory_space<vmem>>, vector<1x32x196xf32>
    %61 = vector.shape_cast %60 : vector<1x32x196xf32> to vector<32x196xf32>
    %62 = vector.shape_cast %59 : vector<32x196xf32> to vector<1x32x196xf32>
    tpu.vector_store %arg4[%c0_6, %c0_7, %c0_8], %62 {strides = array<i32>} : memref<1x32x196xf32, #tpu.memory_space<vmem>>, vector<1x32x196xf32>,
    return
  }
  func.func @transform_0(%arg0: i32) -> (i32, i32, i32) {
    %c0_i32 = arith.constant 0 : i32
    %c0_i32_0 = arith.constant 0 : i32
    %c0_i32_1 = arith.constant 0 : i32
    return %arg0, %c0_i32, %c0_i32_0 : i32, i32, i32
  }
  func.func @transform_1(%arg0: i32) -> (i32, i32) {
    %c0_i32 = arith.constant 0 : i32
    %c0_i32_0 = arith.constant 0 : i32
    %c0_i32_1 = arith.constant 0 : i32
    return %c0_i32, %c0_i32_0 : i32, i32
  }
  func.func @transform_2(%arg0: i32) -> (i32, i32) {
    %c0_i32 = arith.constant 0 : i32
    %c0_i32_0 = arith.constant 0 : i32
    %c0_i32_1 = arith.constant 0 : i32
    return %c0_i32, %c0_i32_0 : i32, i32
  }
  func.func @transform_3(%arg0: i32) -> (i32, i32, i32) {
    %c0_i32 = arith.constant 0 : i32
    %c0_i32_0 = arith.constant 0 : i32
    %c0_i32_1 = arith.constant 0 : i32
    return %arg0, %c0_i32, %c0_i32_0 : i32, i32, i32
  }
}

</mosaic_0001>

<llo_original>
// kernel: squeeze.3
$region0: #{squeeze.3}
  %s0 = inlined_call_operand.vmem [shape: f32[32,3,3], index: 0, kind: input, shape index: {}]
  %s1 = inlined_call_operand.vmem [shape: f32[32,9], index: 1, kind: output, shape index: {}]
  $region1: #{squeeze.3} parent=0
    #allocation0 [shape = 'u8[12288]{0}', space=vmem, size = 0x3000, scoped, tag = 'scoped mem for input reshape']
    %s3 = ssub.s32 16, 1
    %s4 = scalar_lea.vmem %s0, 8
    %v5 = vld [vmem:[%s4] sm:%s3]
    %s6 = scalar_lea.vmem [#allocation0], 16
    %7 = vst [vmem:[%s6] sm:%s3] %v5
    %s8 = scalar_lea.vmem %s0, 4
    %v9 = vld [vmem:[%s8] sm:%s3]
    %s10 = scalar_lea.vmem [#allocation0], 8
    %11 = vst [vmem:[%s10] sm:%s3] %v9
    %v12 = vld [vmem:[%s0] sm:%s3]
    %13 = vst [vmem:[#allocation0] sm:%s3] %v12
    %v14 = vld [vmem:[#allocation0] sm:$0x7]
    %vm15 = vcmask 261120
    %16 = vst.msk [vmem:[%s1] sm:$0x7] %vm15, %v14
    %s17 = scalar_lea.vmem [#allocation0], 8
    %v18 = vld [vmem:[%s17] sm:$0x7]
    %vm19 = vcmask 261120
    %s20 = scalar_lea.vmem %s1, 3
    %21 = vst.msk [vmem:[%s20] sm:$0x7] %vm19, %v18
    %s22 = scalar_lea.vmem [#allocation0], 16
    %v23 = vld [vmem:[%s22] sm:$0x7]
    %vm24 = vcmask 261120
    %s25 = scalar_lea.vmem %s1, 6
    %26 = vst.msk [vmem:[%s25] sm:$0x7] %vm24, %v23

// kernel: conv_forward.1
$region0: #{conv_forward.1}
  #allocation0 [shape = 'u32[]', space=smem, size = 0x4, offset = 0x4, fixed_abs, tag = 'smem constant byte address 0x4 - core index']
  #allocation1 [shape = 'u32[72,128]{1,0:T(1,128)}', space=vmem, size = 0x9000, scoped, tag = 'internal scratch']
  %s0 = inlined_call_operand.vmem [shape: f32[2,9,196], index: 0, kind: input, shape index: {}]
  %s1 = inlined_call_operand.vmem [shape: f32[32,9], index: 1, kind: input, shape index: {}]
  %s2 = inlined_call_operand.vmem [shape: f32[32,1], index: 2, kind: input, shape index: {}]
  %s3 = inlined_call_operand.vmem [shape: f32[2,32,196], index: 3, kind: output, shape index: {}]
  %s4 = sld [smem:[#allocation0]]
  $region45: #{conv_forward.1} parent=0
    _
  %s6 = ssub.s32 1, %s4
  %s7 = scalar_select 0, %s6, %s4
  loop: start=0, step=1, limit=4
  $region2: #{conv_forward.1} parent=0 // loop_pre_header
    _
  $region3: #{conv_forward.1} parent=0 // loop_header
    %s9 = sphi 0, %s13
    %p10 = scmp.ge.s32.totalorder %s9, 4
    %s19 = sphi 0, %s21
    %s22 = sphi 0, %s19
    %s23 = sphi 0, %s22
    %s39 = sphi 0, %s23
    %s43 = sphi 0, %s43
    %s45 = sphi 0, %s43
    %s46 = sphi 0, %s45
    %s60 = sphi 0, %s46
    %s64 = sphi 0, %s64
    %s66 = sphi 0, %s64
    %s67 = sphi 0, %s66
    %s81 = sphi 0, %s67
    %s87 = sphi 0, %s89
    %s90 = sphi 0, %s87
    %s91 = sphi 0, %s90
    %s107 = sphi 0, %s91
  $region4: #{conv_forward.1} parent=0 // loop_header_branch
    %12 = sbr.rel (%p10) target = $region8
  $region5: #{conv_forward.1} parent=0 // loop_body
    %s14 = ssub.s32 %s9, 1
    %s15 = ssub.s32 %s9, 2
    %s16 = sadd.s32 %s9, 1
    %s17 = ssub.s32 %s9, %s16
    %p18 = scmp.eq.s32.totalorder %s17, 0
    %s20 = sadd.s32 %s19, 1
    %s21 = scalar_select %p18, %s19, %s20
    %p24 = pneg %p18
    %p25 = scmp.eq.s32.totalorder %s9, 1
    %p26 = por %p24, %p25
    %p27 = scmp.ne.s32.totalorder %s19, %s22
    %p28 = scmp.eq.s32.totalorder %s9, 0
    %p29 = por %p27, %p28
    %p30 = scmp.ne.s32.totalorder %s19, %s22
    %p31 = scmp.eq.s32.totalorder %s14, 1
    %p32 = por %p30, %p31
    %p33 = scmp.ne.s32.totalorder %s22, %s23
    %p34 = scmp.eq.s32.totalorder %s14, 0
    %p35 = por %p33, %p34
    %p36 = scmp.ne.s32.totalorder %s22, %s23
    %p37 = scmp.eq.s32.totalorder %s15, 1
    %p38 = por %p36, %p37
    %p40 = scmp.ne.s32.totalorder %s23, %s39
    %p41 = scmp.eq.s32.totalorder %s15, 0
    %p42 = por %p40, %p41
    %s44 = sadd.s32 %s43, 1
    %p47 = scmp.eq.s32.totalorder %s9, 1
    %p48 = scmp.ne.s32.totalorder %s43, %s45
    %p49 = scmp.eq.s32.totalorder %s9, 0
    %p50 = por %p48, %p49
    %p51 = scmp.ne.s32.totalorder %s43, %s45
    %p52 = scmp.eq.s32.totalorder %s14, 1
    %p53 = por %p51, %p52
    %p54 = scmp.ne.s32.totalorder %s45, %s46
    %p55 = scmp.eq.s32.totalorder %s14, 0
    %p56 = por %p54, %p55
    %p57 = scmp.ne.s32.totalorder %s45, %s46
    %p58 = scmp.eq.s32.totalorder %s15, 1
    %p59 = por %p57, %p58
    %p61 = scmp.ne.s32.totalorder %s46, %s60
    %p62 = scmp.eq.s32.totalorder %s15, 0
    %p63 = por %p61, %p62
    %s65 = sadd.s32 %s64, 1
    %p68 = scmp.eq.s32.totalorder %s9, 1
    %p69 = scmp.ne.s32.totalorder %s64, %s66
    %p70 = scmp.eq.s32.totalorder %s9, 0
    %p71 = por %p69, %p70
    %p72 = scmp.ne.s32.totalorder %s64, %s66
    %p73 = scmp.eq.s32.totalorder %s14, 1
    %p74 = por %p72, %p73
    %p75 = scmp.ne.s32.totalorder %s66, %s67
    %p76 = scmp.eq.s32.totalorder %s14, 0
    %p77 = por %p75, %p76
    %p78 = scmp.ne.s32.totalorder %s66, %s67
    %p79 = scmp.eq.s32.totalorder %s15, 1
    %p80 = por %p78, %p79
    %p82 = scmp.ne.s32.totalorder %s67, %s81
    %p83 = scmp.eq.s32.totalorder %s15, 0
    %p84 = por %p82, %p83
    %s85 = ssub.s32 %s9, %s16
    %p86 = scmp.eq.s32.totalorder %s85, 0
    %s88 = sadd.s32 %s87, 1
    %s89 = scalar_select %p86, %s87, %s88
    %p92 = pneg %p86
    %p93 = scmp.eq.s32.totalorder %s9, 1
    %p94 = por %p92, %p93
    %p95 = scmp.ne.s32.totalorder %s87, %s90
    %p96 = scmp.eq.s32.totalorder %s9, 0
    %p97 = por %p95, %p96
    %p98 = scmp.ne.s32.totalorder %s87, %s90
    %p99 = scmp.eq.s32.totalorder %s14, 1
    %p100 = por %p98, %p99
    %p101 = scmp.ne.s32.totalorder %s90, %s91
    %p102 = scmp.eq.s32.totalorder %s14, 0
    %p103 = por %p101, %p102
    %p104 = scmp.ne.s32.totalorder %s90, %s91
    %p105 = scmp.eq.s32.totalorder %s15, 1
    %p106 = por %p104, %p105
    %p108 = scmp.ne.s32.totalorder %s91, %s107
    %p109 = scmp.eq.s32.totalorder %s15, 0
    %p110 = por %p108, %p109
    %p111 = scmp.le.s32.totalorder 1, %s9
    %p112 = scmp.lt.s32.totalorder %s9, 3
    %p113 = pnand %p111, %p112
    %p114 = pneg %p113
    // Predicated region
    $region9: #{conv_forward.1} parent=5 // pred_check
      _
    $region10: #{conv_forward.1} parent=5 // pred_check_branch
      %116 = sbr.rel (%p113) target = $region12
    $region11: #{conv_forward.1} parent=5 // pred_region
      %s117 = ssub.s32 %s9, 1
      // Predicated region
      $region13: #{conv_forward.1} parent=11 // pred_check
        %p118 = pneg %p56
      $region14: #{conv_forward.1} parent=11 // pred_check_branch
        %120 = sbr.rel (%p118) target = $region16
      $region15: #{conv_forward.1} parent=11 // pred_region
        _
      $region16: #{conv_forward.1} parent=11 // pred_fallthru
        _
      // Predicated region
      $region17: #{conv_forward.1} parent=11 // pred_check
        %p121 = pneg %p77
      $region18: #{conv_forward.1} parent=11 // pred_check_branch
        %123 = sbr.rel (%p121) target = $region20
      $region19: #{conv_forward.1} parent=11 // pred_region
        _
      $region20: #{conv_forward.1} parent=11 // pred_fallthru
        _
    $region12: #{conv_forward.1} parent=5 // pred_fallthru
      _
    %p124 = scmp.lt.s32.totalorder %s9, 2
    // Predicated region
    $region21: #{conv_forward.1} parent=5 // pred_check
      %p125 = pneg %p124
    $region22: #{conv_forward.1} parent=5 // pred_check_branch
      %127 = sbr.rel (%p125) target = $region24
    $region23: #{conv_forward.1} parent=5 // pred_region
      // Predicated region
      $region25: #{conv_forward.1} parent=23 // pred_check
        %p128 = pneg %p29
      $region26: #{conv_forward.1} parent=23 // pred_check_branch
        %130 = sbr.rel (%p128) target = $region28
      $region27: #{conv_forward.1} parent=23 // pred_region
        %p131 = scmp.lt.s32.totalorder %s9, 1
        %s132 = scalar_select %p131, %s9, 1
        %s133 = smul.addr %s132, 4
        %s134 = smul.addr %s133, 8
        %s135 = scalar_lea.vmem %s0, %s134
      $region28: #{conv_forward.1} parent=23 // pred_fallthru
        _
    $region24: #{conv_forward.1} parent=5 // pred_fallthru
      _
    %p136 = scmp.le.s32.totalorder 1, %s9
    %p137 = scmp.lt.s32.totalorder %s9, 3
    %p138 = pnand %p136, %p137
    %p139 = pneg %p138
    // Predicated region
    $region29: #{conv_forward.1} parent=5 // pred_check
      _
    $region30: #{conv_forward.1} parent=5 // pred_check_branch
      %141 = sbr.rel (%p138) target = $region32
    $region31: #{conv_forward.1} parent=5 // pred_region
      %s142 = ssub.s32 %s9, 1
      %p143 = scmp.lt.s32.totalorder %s14, 1
      %s144 = scalar_select %p143, %s14, 1
      %s145 = smul.addr %s144, 4
      %s146 = smul.addr %s145, 8
      %s147 = scalar_lea.vmem %s0, %s146
      %p148 = pneg %p35
      %p149 = pneg %p32
      %p150 = pneg %p56
      %p151 = pneg %p53
      %p152 = pneg %p77
      %p153 = pneg %p74
      %p154 = pneg %p103
      %p155 = pneg %p100
      %p156 = scmp.lt.s32.totalorder %s14, 1
      %s157 = scalar_select %p156, %s14, 1
      %s158 = smul.addr %s157, 8
      %s159 = smul.addr %s158, 8
      %s160 = scalar_lea.vmem %s3, %s159
      %p161 = scmp.lt.s32.totalorder %s14, 1
      %s162 = scalar_select %p161, %s14, 1
      %s163 = smul.addr %s162, 4
      %s164 = smul.addr %s163, 8
      %s165 = scalar_lea.vmem %s0, %s164
      %p166 = scmp.lt.s32.totalorder %s14, 1
      %s167 = scalar_select %p166, %s14, 1
      %s168 = smul.addr %s167, 8
      %s169 = smul.addr %s168, 8
      %s170 = scalar_lea.vmem %s3, %s169
      %v171 = vld [vmem:[%s1] sm:$0xff]
      %v172 = vld [vmem:[%s1 + $0x8] sm:$0xff]
      %v173 = vld [vmem:[%s1 + $0x10] sm:$0xff]
      %v174 = vld [vmem:[%s1 + $0x18] sm:$0xff]
      %v175 = vld [vmem:[%s2] sm:$0xff]
      %v176 = vld [vmem:[%s2 + $0x8] sm:$0xff]
      %v177 = vld [vmem:[%s2 + $0x10] sm:$0xff]
      %v178 = vld [vmem:[%s2 + $0x18] sm:$0xff]
      %v179 = vld [vmem:[%s165] sm:$0xff]
      %v180 = vld [vmem:[%s165 + $0x8] sm:$0xff]
      %v181 = vld [vmem:[%s165 + $0x10] sm:$0x1]
      %v182 = vld [vmem:[%s165 + $0x18] sm:$0x1]
      %184 = vset.pattern.permute.xlu0 0
      %185 = vperm.xlu0 %184, %v175
      %v186 = vpop.permute.xlu0 %185
      %189 = vset.pattern.permute.xlu0 0
      %190 = vperm.xlu0 %189, %v176
      %v191 = vpop.permute.xlu0 %190
      %194 = vset.pattern.permute.xlu0 0
      %195 = vperm.xlu0 %194, %v177
      %v196 = vpop.permute.xlu0 %195
      %199 = vset.pattern.permute.xlu0 0
      %200 = vperm.xlu0 %199, %v178
      %v201 = vpop.permute.xlu0 %200
      %204 = vset.pattern.permute.xlu0 0
      %205 = vperm.xlu0 %204, %v171
      %v206 = vpop.permute.xlu0 %205
      %209 = vset.pattern.permute.xlu0 0
      %210 = vperm.xlu0 %209, %v172
      %v211 = vpop.permute.xlu0 %210
      %214 = vset.pattern.permute.xlu0 0
      %215 = vperm.xlu0 %214, %v173
      %v216 = vpop.permute.xlu0 %215
      %219 = vset.pattern.permute.xlu0 0
      %220 = vperm.xlu0 %219, %v174
      %v221 = vpop.permute.xlu0 %220
      %v223 = vperm.slane %v179, 0
      %v224 = vperm.slane %v180, 0
      %v225 = vmul.f32 %v206, %v223
      %v226 = vmul.f32 %v206, %v224
      %v227 = vmul.f32 %v211, %v223
      %v228 = vmul.f32 %v211, %v224
      %v229 = vmul.f32 %v216, %v223
      %v230 = vmul.f32 %v216, %v224
      %v231 = vmul.f32 %v221, %v223
      %v232 = vmul.f32 %v221, %v224
      %v233 = vadd.f32 %v186, %v225
      %v234 = vadd.f32 %v186, %v226
      %v235 = vadd.f32 %v191, %v227
      %v236 = vadd.f32 %v191, %v228
      %v237 = vadd.f32 %v196, %v229
      %v238 = vadd.f32 %v196, %v230
      %v239 = vadd.f32 %v201, %v231
      %v240 = vadd.f32 %v201, %v232
      %241 = vset.pattern.permute.xlu0 1
      %242 = vperm.xlu0 %241, %v171
      %v243 = vpop.permute.xlu0 %242
      %245 = vset.pattern.permute.xlu0 1
      %246 = vperm.xlu0 %245, %v172
      %v247 = vpop.permute.xlu0 %246
      %249 = vset.pattern.permute.xlu0 1
      %250 = vperm.xlu0 %249, %v173
      %v251 = vpop.permute.xlu0 %250
      %253 = vset.pattern.permute.xlu0 1
      %254 = vperm.xlu0 %253, %v174
      %v255 = vpop.permute.xlu0 %254
      %v257 = vperm.slane %v179, 1
      %v258 = vperm.slane %v180, 1
      %v259 = vmul.f32 %v243, %v257
      %v260 = vmul.f32 %v243, %v258
      %v261 = vmul.f32 %v247, %v257
      %v262 = vmul.f32 %v247, %v258
      %v263 = vmul.f32 %v251, %v257
      %v264 = vmul.f32 %v251, %v258
      %v265 = vmul.f32 %v255, %v257
      %v266 = vmul.f32 %v255, %v258
      %v267 = vadd.f32 %v233, %v259
      %v268 = vadd.f32 %v234, %v260
      %v269 = vadd.f32 %v235, %v261
      %v270 = vadd.f32 %v236, %v262
      %v271 = vadd.f32 %v237, %v263
      %v272 = vadd.f32 %v238, %v264
      %v273 = vadd.f32 %v239, %v265
      %v274 = vadd.f32 %v240, %v266
      %275 = vset.pattern.permute.xlu0 2
      %276 = vperm.xlu0 %275, %v171
      %v277 = vpop.permute.xlu0 %276
      %279 = vset.pattern.permute.xlu0 2
      %280 = vperm.xlu0 %279, %v172
      %v281 = vpop.permute.xlu0 %280
      %283 = vset.pattern.permute.xlu0 2
      %284 = vperm.xlu0 %283, %v173
      %v285 = vpop.permute.xlu0 %284
      %287 = vset.pattern.permute.xlu0 2
      %288 = vperm.xlu0 %287, %v174
      %v289 = vpop.permute.xlu0 %288
      %v291 = vperm.slane %v179, 2
      %v292 = vperm.slane %v180, 2
      %v293 = vmul.f32 %v277, %v291
      %v294 = vmul.f32 %v277, %v292
      %v295 = vmul.f32 %v281, %v291
      %v296 = vmul.f32 %v281, %v292
      %v297 = vmul.f32 %v285, %v291
      %v298 = vmul.f32 %v285, %v292
      %v299 = vmul.f32 %v289, %v291
      %v300 = vmul.f32 %v289, %v292
      %v301 = vadd.f32 %v267, %v293
      %v302 = vadd.f32 %v268, %v294
      %v303 = vadd.f32 %v269, %v295
      %v304 = vadd.f32 %v270, %v296
      %v305 = vadd.f32 %v271, %v297
      %v306 = vadd.f32 %v272, %v298
      %v307 = vadd.f32 %v273, %v299
      %v308 = vadd.f32 %v274, %v300
      %309 = vset.pattern.permute.xlu0 3
      %310 = vperm.xlu0 %309, %v171
      %v311 = vpop.permute.xlu0 %310
      %313 = vset.pattern.permute.xlu0 3
      %314 = vperm.xlu0 %313, %v172
      %v315 = vpop.permute.xlu0 %314
      %317 = vset.pattern.permute.xlu0 3
      %318 = vperm.xlu0 %317, %v173
      %v319 = vpop.permute.xlu0 %318
      %321 = vset.pattern.permute.xlu0 3
      %322 = vperm.xlu0 %321, %v174
      %v323 = vpop.permute.xlu0 %322
      %v325 = vperm.slane %v179, 3
      %v326 = vperm.slane %v180, 3
      %v327 = vmul.f32 %v311, %v325
      %v328 = vmul.f32 %v311, %v326
      %v329 = vmul.f32 %v315, %v325
      %v330 = vmul.f32 %v315, %v326
      %v331 = vmul.f32 %v319, %v325
      %v332 = vmul.f32 %v319, %v326
      %v333 = vmul.f32 %v323, %v325
      %v334 = vmul.f32 %v323, %v326
      %v335 = vadd.f32 %v301, %v327
      %v336 = vadd.f32 %v302, %v328
      %v337 = vadd.f32 %v303, %v329
      %v338 = vadd.f32 %v304, %v330
      %v339 = vadd.f32 %v305, %v331
      %v340 = vadd.f32 %v306, %v332
      %v341 = vadd.f32 %v307, %v333
      %v342 = vadd.f32 %v308, %v334
      %343 = vset.pattern.permute.xlu0 4
      %344 = vperm.xlu0 %343, %v171
      %v345 = vpop.permute.xlu0 %344
      %347 = vset.pattern.permute.xlu0 4
      %348 = vperm.xlu0 %347, %v172
      %v349 = vpop.permute.xlu0 %348
      %351 = vset.pattern.permute.xlu0 4
      %352 = vperm.xlu0 %351, %v173
      %v353 = vpop.permute.xlu0 %352
      %355 = vset.pattern.permute.xlu0 4
      %356 = vperm.xlu0 %355, %v174
      %v357 = vpop.permute.xlu0 %356
      %v359 = vperm.slane %v179, 4
      %v360 = vperm.slane %v180, 4
      %v361 = vmul.f32 %v345, %v359
      %v362 = vmul.f32 %v345, %v360
      %v363 = vmul.f32 %v349, %v359
      %v364 = vmul.f32 %v349, %v360
      %v365 = vmul.f32 %v353, %v359
      %v366 = vmul.f32 %v353, %v360
      %v367 = vmul.f32 %v357, %v359
      %v368 = vmul.f32 %v357, %v360
      %v369 = vadd.f32 %v335, %v361
      %v370 = vadd.f32 %v336, %v362
      %v371 = vadd.f32 %v337, %v363
      %v372 = vadd.f32 %v338, %v364
      %v373 = vadd.f32 %v339, %v365
      %v374 = vadd.f32 %v340, %v366
      %v375 = vadd.f32 %v341, %v367
      %v376 = vadd.f32 %v342, %v368
      %377 = vset.pattern.permute.xlu0 5
      %378 = vperm.xlu0 %377, %v171
      %v379 = vpop.permute.xlu0 %378
      %381 = vset.pattern.permute.xlu0 5
      %382 = vperm.xlu0 %381, %v172
      %v383 = vpop.permute.xlu0 %382
      %385 = vset.pattern.permute.xlu0 5
      %386 = vperm.xlu0 %385, %v173
      %v387 = vpop.permute.xlu0 %386
      %389 = vset.pattern.permute.xlu0 5
      %390 = vperm.xlu0 %389, %v174
      %v391 = vpop.permute.xlu0 %390
      %v393 = vperm.slane %v179, 5
      %v394 = vperm.slane %v180, 5
      %v395 = vmul.f32 %v379, %v393
      %v396 = vmul.f32 %v379, %v394
      %v397 = vmul.f32 %v383, %v393
      %v398 = vmul.f32 %v383, %v394
      %v399 = vmul.f32 %v387, %v393
      %v400 = vmul.f32 %v387, %v394
      %v401 = vmul.f32 %v391, %v393
      %v402 = vmul.f32 %v391, %v394
      %v403 = vadd.f32 %v369, %v395
      %v404 = vadd.f32 %v370, %v396
      %v405 = vadd.f32 %v371, %v397
      %v406 = vadd.f32 %v372, %v398
      %v407 = vadd.f32 %v373, %v399
      %v408 = vadd.f32 %v374, %v400
      %v409 = vadd.f32 %v375, %v401
      %v410 = vadd.f32 %v376, %v402
      %411 = vset.pattern.permute.xlu0 6
      %412 = vperm.xlu0 %411, %v171
      %v413 = vpop.permute.xlu0 %412
      %415 = vset.pattern.permute.xlu0 6
      %416 = vperm.xlu0 %415, %v172
      %v417 = vpop.permute.xlu0 %416
      %419 = vset.pattern.permute.xlu0 6
      %420 = vperm.xlu0 %419, %v173
      %v421 = vpop.permute.xlu0 %420
      %423 = vset.pattern.permute.xlu0 6
      %424 = vperm.xlu0 %423, %v174
      %v425 = vpop.permute.xlu0 %424
      %v427 = vperm.slane %v179, 6
      %v428 = vperm.slane %v180, 6
      %v429 = vmul.f32 %v413, %v427
      %v430 = vmul.f32 %v413, %v428
      %v431 = vmul.f32 %v417, %v427
      %v432 = vmul.f32 %v417, %v428
      %v433 = vmul.f32 %v421, %v427
      %v434 = vmul.f32 %v421, %v428
      %v435 = vmul.f32 %v425, %v427
      %v436 = vmul.f32 %v425, %v428
      %v437 = vadd.f32 %v403, %v429
      %v438 = vadd.f32 %v404, %v430
      %v439 = vadd.f32 %v405, %v431
      %v440 = vadd.f32 %v406, %v432
      %v441 = vadd.f32 %v407, %v433
      %v442 = vadd.f32 %v408, %v434
      %v443 = vadd.f32 %v409, %v435
      %v444 = vadd.f32 %v410, %v436
      %445 = vset.pattern.permute.xlu0 7
      %446 = vperm.xlu0 %445, %v171
      %v447 = vpop.permute.xlu0 %446
      %449 = vset.pattern.permute.xlu0 7
      %450 = vperm.xlu0 %449, %v172
      %v451 = vpop.permute.xlu0 %450
      %453 = vset.pattern.permute.xlu0 7
      %454 = vperm.xlu0 %453, %v173
      %v455 = vpop.permute.xlu0 %454
      %457 = vset.pattern.permute.xlu0 7
      %458 = vperm.xlu0 %457, %v174
      %v459 = vpop.permute.xlu0 %458
      %v461 = vperm.slane %v179, 7
      %v462 = vperm.slane %v180, 7
      %v463 = vmul.f32 %v447, %v461
      %v464 = vmul.f32 %v447, %v462
      %v465 = vmul.f32 %v451, %v461
      %v466 = vmul.f32 %v451, %v462
      %v467 = vmul.f32 %v455, %v461
      %v468 = vmul.f32 %v455, %v462
      %v469 = vmul.f32 %v459, %v461
      %v470 = vmul.f32 %v459, %v462
      %v471 = vadd.f32 %v437, %v463
      %v472 = vadd.f32 %v438, %v464
      %v473 = vadd.f32 %v439, %v465
      %v474 = vadd.f32 %v440, %v466
      %v475 = vadd.f32 %v441, %v467
      %v476 = vadd.f32 %v442, %v468
      %v477 = vadd.f32 %v443, %v469
      %v478 = vadd.f32 %v444, %v470
      %479 = vset.pattern.permute.xlu0 8
      %480 = vperm.xlu0 %479, %v171
      %v481 = vpop.permute.xlu0 %480
      %483 = vset.pattern.permute.xlu0 8
      %484 = vperm.xlu0 %483, %v172
      %v485 = vpop.permute.xlu0 %484
      %487 = vset.pattern.permute.xlu0 8
      %488 = vperm.xlu0 %487, %v173
      %v489 = vpop.permute.xlu0 %488
      %491 = vset.pattern.permute.xlu0 8
      %492 = vperm.xlu0 %491, %v174
      %v493 = vpop.permute.xlu0 %492
      %v495 = vperm.slane %v181, 0
      %v496 = vperm.slane %v182, 0
      %v497 = vmul.f32 %v481, %v495
      %v498 = vmul.f32 %v481, %v496
      %v499 = vmul.f32 %v485, %v495
      %v500 = vmul.f32 %v485, %v496
      %v501 = vmul.f32 %v489, %v495
      %v502 = vmul.f32 %v489, %v496
      %v503 = vmul.f32 %v493, %v495
      %v504 = vmul.f32 %v493, %v496
      %v505 = vadd.f32 %v471, %v497
      %v506 = vadd.f32 %v472, %v498
      %v507 = vadd.f32 %v473, %v499
      %v508 = vadd.f32 %v474, %v500
      %v509 = vadd.f32 %v475, %v501
      %v510 = vadd.f32 %v476, %v502
      %v511 = vadd.f32 %v477, %v503
      %v512 = vadd.f32 %v478, %v504
      %513 = vst [vmem:[%s170] sm:$0xff] %v505
      %vm514 = vcmask 556032
      %515 = vst.msk [vmem:[%s170 + $0x8] sm:$0xff] %vm514, %v506
      %516 = vst [vmem:[%s170 + $0x10] sm:$0xff] %v507
      %517 = vst.msk [vmem:[%s170 + $0x18] sm:$0xff] %vm514, %v508
      %518 = vst [vmem:[%s170 + $0x20] sm:$0xff] %v509
      %519 = vst.msk [vmem:[%s170 + $0x28] sm:$0xff] %vm514, %v510
      %520 = vst [vmem:[%s170 + $0x30] sm:$0xff] %v511
      %521 = vst.msk [vmem:[%s170 + $0x38] sm:$0xff] %vm514, %v512
      %p522 = scmp.lt.s32.totalorder %s14, 1
      %s523 = scalar_select %p522, %s14, 1
      %s524 = smul.addr %s523, 8
      %s525 = smul.addr %s524, 8
      %s526 = scalar_lea.vmem %s3, %s525
      // Predicated region
      $region33: #{conv_forward.1} parent=31 // pred_check
        %p527 = pneg %p100
      $region34: #{conv_forward.1} parent=31 // pred_check_branch
        %529 = sbr.rel (%p527) target = $region36
      $region35: #{conv_forward.1} parent=31 // pred_region
        _
      $region36: #{conv_forward.1} parent=31 // pred_fallthru
        _
    $region32: #{conv_forward.1} parent=5 // pred_fallthru
      _
    %p530 = scmp.le.s32.totalorder 2, %s9
    // Predicated region
    $region37: #{conv_forward.1} parent=5 // pred_check
      %p531 = pneg %p530
    $region38: #{conv_forward.1} parent=5 // pred_check_branch
      %533 = sbr.rel (%p531) target = $region40
    $region39: #{conv_forward.1} parent=5 // pred_region
      %s534 = ssub.s32 %s9, 2
      // Predicated region
      $region41: #{conv_forward.1} parent=39 // pred_check
        %p535 = pneg %p106
      $region42: #{conv_forward.1} parent=39 // pred_check_branch
        %537 = sbr.rel (%p535) target = $region44
      $region43: #{conv_forward.1} parent=39 // pred_region
        %p538 = scmp.lt.s32.totalorder %s15, 1
        %s539 = scalar_select %p538, %s15, 1
        %s540 = smul.addr %s539, 8
        %s541 = smul.addr %s540, 8
        %s542 = scalar_lea.vmem %s3, %s541
      $region44: #{conv_forward.1} parent=39 // pred_fallthru
        _
    $region40: #{conv_forward.1} parent=5 // pred_fallthru
      _
  $region6: #{conv_forward.1} parent=0 // loop_footer
    %s13 = sadd.s32 1, %s9
  $region7: #{conv_forward.1} parent=0 // loop_footer_branch
    %8 = sbr.rel target = $region3
  $region8: #{conv_forward.1} parent=0 // loop_exit
    _

</llo_original>
